<compile_context>
chip_gen: v7x
topology: tpu7x:2x2x1
jax: 0.10.0
libtpu: 0.0.40
codegen_flags: <defaults>
</compile_context>

<pallas_src>
import jax
import jax.numpy as jnp
from jax.experimental import pallas as pl
from jax.experimental.pallas import tpu as pltpu


def _round_up(x: int, m: int) -> int:
    return -(-x // m) * m


def _topkonly_kernel(data_ref, seq_ref, out_ref):
    # data_ref: (1, TN) f32   -- lane-dense slice of the item buffer
    # seq_ref : (TB, 1) f32   -- first item of each sequence in this batch tile
    # out_ref : (TB, TN) f32
    # Broadcast-copy the data slice to every row of the output tile.
    out_ref[...] = jnp.broadcast_to(data_ref[...], out_ref.shape)

    # Only the first column-tile contains global column 0: add item_seq[:, 0] there.
    @pl.when(pl.program_id(1) == 0)
    def _():
        out_ref[:, 0:1] = data_ref[:, 0:1] + seq_ref[...]


def topkonly_forward(data, item_seq, _item_seq_len=None):
    """data: (n_items,) f32; item_seq: (B, L) int -> (B, n_items) f32."""
    n_items = data.shape[0]
    batch = item_seq.shape[0]

    # Only column 0 of item_seq is ever used -> slice + cast in the wrapper so the
    # kernel never DMAs the full (B, L) buffer and does no per-tile converts.
    seq_first = item_seq[:, :1].astype(jnp.float32)        # (B, 1)
    data2d = data.reshape(1, n_items).astype(jnp.float32)  # (1, N)

    # Tiles: rows a multiple of 8, lanes a multiple of 128.  Up to 512x4096 f32
    # (8 MiB, 16 MiB double-buffered) -- fits the 32 MiB limit on every chip.
    tb = min(512, _round_up(batch, 8))
    tn = min(4096, _round_up(n_items, 128))

    grid = (pl.cdiv(batch, tb), pl.cdiv(n_items, tn))

    out = pl.pallas_call(
        _topkonly_kernel,
        out_shape=jax.ShapeDtypeStruct((batch, n_items), jnp.float32),
        grid_spec=pltpu.PrefetchScalarGridSpec(
            num_scalar_prefetch=0,
            grid=grid,
            in_specs=[
                # data: one lane-dense row slice per column tile (re-read is ~1/tb
                # of the write traffic -- negligible).
                pl.BlockSpec((1, tn), lambda i, j: (0, j)),
                # first sequence item per batch-tile row
                pl.BlockSpec((tb, 1), lambda i, j: (i, 0)),
            ],
            out_specs=pl.BlockSpec((tb, tn), lambda i, j: (i, j)),
        ),
        compiler_params=pltpu.CompilerParams(
            # Independent tiles -> both axes parallel (shards across v7x's 2 TCs
            # whenever the grid has >1 tile; a no-op on v5e/v6e).
            dimension_semantics=("parallel", "parallel"),
            # 8 MiB out tile double-buffered + tiny inputs: ample headroom.
            vmem_limit_bytes=32 * 1024 * 1024,
        ),
    )(data2d, seq_first)

    return out


if __name__ == "__main__":
    key = jax.random.PRNGKey(0)
    k_data, k_seq = jax.random.split(key)

    n_items = 512
    batch = 2
    seq_len = 8

    # Deterministic parameter init mirroring torch.randint(n_items, (n_items,)).float()
    data = jax.random.randint(k_data, (n_items,), 0, n_items, dtype=jnp.int32).astype(
        jnp.float32
    )
    item_seq = jax.random.randint(k_seq, (batch, seq_len), 0, n_items, dtype=jnp.int32)
    item_seq_len = jnp.full((batch,), seq_len, dtype=jnp.int32)

    out = topkonly_forward(data, item_seq, item_seq_len)
    out = jax.block_until_ready(out)

    # Reference check (plain JAX)
    ref = jnp.broadcast_to(data[None, :], (batch, n_items))
    ref = ref.at[:, 0].add(item_seq[:, 0].astype(jnp.float32))
    assert out.shape == (batch, n_items)
    assert out.dtype == jnp.float32
    assert jnp.allclose(out, ref), "mismatch vs reference"

    print("KERNEL_OK")
</pallas_src>

<mosaic_0001>
module attributes {stable_mosaic.version = 11 : i64} {
  func.func @_topkonly_kernel(%arg0: i32, %arg1: i32, %arg2: memref<1x512xf32, #tpu.memory_space<vmem>>, %arg3: memref<8x1xf32, #tpu.memory_space<vmem>>, %arg4: memref<8x512xf32, #tpu.memory_space<vmem>>) attributes {dimension_semantics = [#tpu.dimension_semantics<parallel>, #tpu.dimension_semantics<parallel>], iteration_bounds = array<i64: 1, 1>, scalar_prefetch = 0 : i64, scratch_operands = 0 : i64, tpu.core_type = #tpu.core_type<tc>, window_params = [{transform_indices = @transform_0, window_bounds = array<i64: 1, 512>}, {transform_indices = @transform_1, window_bounds = array<i64: 8, 1>}, {transform_indices = @transform_2, window_bounds = array<i64: 8, 512>}]} {
    %c0 = arith.constant 0 : index
    %c0_0 = arith.constant 0 : index
    %0 = vector.load %arg2[%c0, %c0_0] : memref<1x512xf32, #tpu.memory_space<vmem>>, vector<1x512xf32>
    %1 = vector.shape_cast %0 : vector<1x512xf32> to vector<1x512xf32>
    %2 = vector.broadcast %1 : vector<1x512xf32> to vector<8x512xf32>
    %c0_1 = arith.constant 0 : index
    %c0_2 = arith.constant 0 : index
    %3 = vector.load %arg4[%c0_1, %c0_2] : memref<8x512xf32, #tpu.memory_space<vmem>>, vector<8x512xf32>
    tpu.vector_store %arg4[%c0_1, %c0_2], %2 {strides = array<i32>} : memref<8x512xf32, #tpu.memory_space<vmem>>, vector<8x512xf32>,
    %c0_i32 = arith.constant 0 : i32
    %4 = arith.cmpi eq, %arg1, %c0_i32 : i32
    %5 = arith.extui %4 : i1 to i32
    %c0_i32_3 = arith.constant 0 : i32
    %6 = arith.cmpi ne, %5, %c0_i32_3 : i32
    scf.if %6 {
      %c0_4 = arith.constant 0 : index
      %c0_5 = arith.constant 0 : index
      %7 = vector.load %arg2[%c0_4, %c0_5] : memref<1x512xf32, #tpu.memory_space<vmem>>, vector<1x1xf32>
      %c0_6 = arith.constant 0 : index
      %c0_7 = arith.constant 0 : index
      %8 = vector.load %arg3[%c0_6, %c0_7] : memref<8x1xf32, #tpu.memory_space<vmem>>, vector<8x1xf32>
      %9 = vector.broadcast %7 : vector<1x1xf32> to vector<8x1xf32>
      %10 = arith.addf %9, %8 : vector<8x1xf32>
      %c0_8 = arith.constant 0 : index
      %c0_9 = arith.constant 0 : index
      %11 = vector.load %arg4[%c0_8, %c0_9] : memref<8x512xf32, #tpu.memory_space<vmem>>, vector<8x1xf32>
      tpu.vector_store %arg4[%c0_8, %c0_9], %10 {strides = array<i32>} : memref<8x512xf32, #tpu.memory_space<vmem>>, vector<8x1xf32>,
    } else {
    }
    return
  }
  func.func @transform_0(%arg0: i32, %arg1: i32) -> (i32, i32) {
    %c0_i32 = arith.constant 0 : i32
    %c0_i32_0 = arith.constant 0 : i32
    return %c0_i32, %arg1 : i32, i32
  }
  func.func @transform_1(%arg0: i32, %arg1: i32) -> (i32, i32) {
    %c0_i32 = arith.constant 0 : i32
    %c0_i32_0 = arith.constant 0 : i32
    return %arg0, %c0_i32 : i32, i32
  }
  func.func @transform_2(%arg0: i32, %arg1: i32) -> (i32, i32) {
    %c0_i32 = arith.constant 0 : i32
    return %arg0, %arg1 : i32, i32
  }
}

</mosaic_0001>

<llo_original>
// kernel: tpu_custom_call.1
$region0: #{tpu_custom_call.1}
  #allocation0 [shape = 'u32[]', space=smem, size = 0x4, offset = 0x4, fixed_abs, tag = 'smem constant byte address 0x4 - core index']
  #allocation1 [shape = 'u32[144,128]{1,0:T(1,128)}', space=vmem, size = 0x12000, scoped, tag = 'internal scratch']
  %s0 = inlined_call_operand.hbm [shape: f32[1,512], index: 0, kind: input, shape index: {}]
  %s1 = inlined_call_operand.vmem [shape: f32[2,1], index: 1, kind: input, shape index: {}]
  %s2 = inlined_call_operand.hbm [shape: f32[2,512], index: 2, kind: output, shape index: {}]
  %s3 = sld [smem:[#allocation0]]
  $region26: #{tpu_custom_call.1} parent=0
    _
  %s5 = ssub.s32 1, %s3
  %s6 = scalar_select 0, %s5, %s3
  $region1: #{tpu_custom_call.1} parent=0
    #allocation2 [shape = 'u8[2048]{0}', space=vmem, size = 0x800, scoped, tag = 'input window, operand 0, single buffered']
    #allocation3 [shape = 's32[1]{0}', space=sflag, size = 0x4, scoped, tag = 'scoped memory for tpu_custom_call.1']
    #allocation4 [shape = 's32[1]{0}', space=sflag, size = 0x4, scoped, tag = 'scoped memory for tpu_custom_call.1']
    #allocation5 [shape = 'u8[16384]{0}', space=vmem, size = 0x4000, scoped, tag = 'output window, operand 0, single buffered']
    %7 = vsyncpa [#allocation3], 0
    %8 = vsyncpa [#allocation4], 0
    // Predicated region
    $region2: #{tpu_custom_call.1} parent=1 // pred_check
      _
    $region3: #{tpu_custom_call.1} parent=1 // pred_check_branch
      %10 = sbr.rel (0) target = $region5
    $region4: #{tpu_custom_call.1} parent=1 // pred_region
      %s12 = ssub.s32 64, 64
      %13 = vsyncadd [#allocation3], %s12
      %s15 = sshll.u32 [#allocation2], 4
      %s16 = int_to_ptr.vmem [resolvable:$true] %s15
      %18 = dma.hbm_to_vmem [thread:$0]  %s0, 64, %s16, [#allocation3]
    $region5: #{tpu_custom_call.1} parent=1 // pred_fallthru
      _
    // Predicated region
    $region6: #{tpu_custom_call.1} parent=1 // pred_check
      _
    $region7: #{tpu_custom_call.1} parent=1 // pred_check_branch
      %20 = sbr.rel (0) target = $region9
    $region8: #{tpu_custom_call.1} parent=1 // pred_region
      _
    $region9: #{tpu_custom_call.1} parent=1 // pred_fallthru
      _
    // Predicated region
    $region10: #{tpu_custom_call.1} parent=1 // pred_check
      _
    $region11: #{tpu_custom_call.1} parent=1 // pred_check_branch
      %22 = sbr.rel (0) target = $region13
    $region12: #{tpu_custom_call.1} parent=1 // pred_region
      %23 = dma.done [#allocation3], 64
    $region13: #{tpu_custom_call.1} parent=1 // pred_fallthru
      _
    %v24 = vld [vmem:[#allocation2] sm:$0xf]
    %v26 = vlaneseq
    %v27 = vshrl.u32 %v26, 7
    %v28 = vsub.s32 0, %v27
    %v29 = vrot.slane %v24, %v28
    %v30 = vlaneseq
    %v31 = vshrl.u32 %v30, 7
    %v32 = vsub.s32 1, %v31
    %v33 = vrot.slane %v24, %v32
    %v34 = vlaneseq
    %v35 = vshrl.u32 %v34, 7
    %v36 = vsub.s32 2, %v35
    %v37 = vrot.slane %v24, %v36
    %v38 = vlaneseq
    %v39 = vshrl.u32 %v38, 7
    %v40 = vsub.s32 3, %v39
    %v41 = vrot.slane %v24, %v40
    %v42 = vcombine.low %v29, %v33
    %v43 = vcombine.high %v29, %v33
    %v44 = vcombine.low %v37, %v41
    %v45 = vcombine.high %v37, %v41
    %v47 = vunpack.c.l.s4 1983009808
    %v48 = vunpack.c.0.s8 %v47
    %v49 = vlaneseq
    %v50 = vshrl.u32 %v49, 7
    %v51 = vsub.s32 %v48, %v50
    %v52 = vrot.slane %v42, %v51
    %v54 = vunpack.c.l.s4 1983009808
    %v55 = vunpack.c.0.s8 %v54
    %v56 = vlaneseq
    %v57 = vshrl.u32 %v56, 7
    %v58 = vsub.s32 %v55, %v57
    %v59 = vrot.slane %v43, %v58
    %v61 = vunpack.c.l.s4 1983009808
    %v62 = vunpack.c.0.s8 %v61
    %v63 = vlaneseq
    %v64 = vshrl.u32 %v63, 7
    %v65 = vsub.s32 %v62, %v64
    %v66 = vrot.slane %v44, %v65
    %v68 = vunpack.c.l.s4 1983009808
    %v69 = vunpack.c.0.s8 %v68
    %v70 = vlaneseq
    %v71 = vshrl.u32 %v70, 7
    %v72 = vsub.s32 %v69, %v71
    %v73 = vrot.slane %v45, %v72
    %v74 = vcombine.low %v52, %v66
    %v75 = vcombine.high %v52, %v66
    %v76 = vcombine.low %v59, %v73
    %v77 = vcombine.high %v59, %v73
    %82 = vst [vmem:[#allocation5] sm:$0xff] %v74
    %83 = vst [vmem:[#allocation5 + $0x8] sm:$0xff] %v75
    %84 = vst [vmem:[#allocation5 + $0x10] sm:$0xff] %v76
    %85 = vst [vmem:[#allocation5 + $0x18] sm:$0xff] %v77
    %p86 = scmp.eq.s32.totalorder 0, 0
    // Predicated region
    $region14: #{tpu_custom_call.1} parent=1 // pred_check
      %p87 = pneg %p86
    $region15: #{tpu_custom_call.1} parent=1 // pred_check_branch
      %89 = sbr.rel (%p87) target = $region17
    $region16: #{tpu_custom_call.1} parent=1 // pred_region
      %v90 = vld [vmem:[#allocation2] sm:$0x1]
      %v91 = vld [vmem:[%s1] sm:$0xff]
      %v93 = vlaneseq
      %v94 = vshrl.u32 %v93, 7
      %v95 = vsub.s32 0, %v94
      %v96 = vrot.slane %v90, %v95
      %v98 = vadd.f32 %v96, %v91
      %v100 = vcombine.high %v98, %v98
      %v102 = vunpack.c.l.s4 1983009808
      %v103 = vunpack.c.0.s8 %v102
      %v104 = vlaneseq
      %v105 = vshrl.u32 %v104, 7
      %v106 = vsub.s32 %v103, %v105
      %v107 = vrot.slane %v98, %v106
      %v109 = vunpack.c.l.s4 1983009808
      %v110 = vunpack.c.0.s8 %v109
      %v111 = vlaneseq
      %v112 = vshrl.u32 %v111, 7
      %v113 = vsub.s32 %v110, %v112
      %v114 = vrot.slane %v100, %v113
      %v115 = vcombine.high %v107, %v107
      %v116 = vcombine.high %v114, %v114
      %vm121 = vcmask 1024
      %122 = vst.msk [vmem:[#allocation5] sm:$0x3] %vm121, %v107
      %123 = vst.msk [vmem:[#allocation5 + $0x8] sm:$0x3] %vm121, %v115
      %124 = vst.msk [vmem:[#allocation5 + $0x10] sm:$0x3] %vm121, %v114
      %125 = vst.msk [vmem:[#allocation5 + $0x18] sm:$0x3] %vm121, %v116
    $region17: #{tpu_custom_call.1} parent=1 // pred_fallthru
      _
    // Predicated region
    $region18: #{tpu_custom_call.1} parent=1 // pred_check
      _
    $region19: #{tpu_custom_call.1} parent=1 // pred_check_branch
      %127 = sbr.rel (0) target = $region21
    $region20: #{tpu_custom_call.1} parent=1 // pred_region
      %s129 = ssub.s32 512, 128
      %130 = vsyncadd [#allocation4], %s129
      %s131 = sshll.u32 [#allocation5], 4
      %s132 = int_to_ptr.vmem [resolvable:$true] %s131
      %137 = dma.vmem_to_hbm [thread:$0]  %s132, 128, %s2, [#allocation4], 128, 128, 8
    $region21: #{tpu_custom_call.1} parent=1 // pred_fallthru
      _
    // Predicated region
    $region22: #{tpu_custom_call.1} parent=1 // pred_check
      _
    $region23: #{tpu_custom_call.1} parent=1 // pred_check_branch
      %139 = sbr.rel (0) target = $region25
    $region24: #{tpu_custom_call.1} parent=1 // pred_region
      %140 = dma.done [#allocation4], 512
    $region25: #{tpu_custom_call.1} parent=1 // pred_fallthru
      _
    %141 = vsyncpa [#allocation3], 1
    %142 = vsyncpa [#allocation4], 1

</llo_original>
